<compile_context>
chip_gen: v7x
topology: tpu7x:2x2x1
jax: 0.10.0
libtpu: 0.0.40
codegen_flags: <defaults>
</compile_context>

<pallas_src>
import jax
import jax.numpy as jnp
from jax.experimental import pallas as pl
from jax.experimental.pallas import tpu as pltpu


NEG_SLOPE = 0.01      # PyTorch F.leaky_relu default
LANE = 128
BT_MAX = 8192         # batch-tile cap (multiple of 128); ~few MiB of VMEM incl. temps


def _leaky_relu(x):
    return jnp.where(x >= 0, x, NEG_SLOPE * x)


def _round_up(n, m):
    return ((n + m - 1) // m) * m


# ---------------------------------------------------------------------------
# Kernel
# ---------------------------------------------------------------------------
def net_kernel(w_ref, x_ref, o_ref):
    # w_ref: (32, 128) packed parameter slab (resident across the grid)
    # x_ref: (5, BT)   batch-on-lanes activation tile
    # o_ref: (1, BT)   lane-dense output tile
    x = x_ref[...]                                   # (5, BT) f32

    # ---- fc1 + leaky_relu : h1[m,b] = sum_k w1[m,k]*x[k,b] + b1[m] --------
    acc1 = w_ref[0:16, 5:6]                          # b1 (16, 1)
    for k in range(5):
        acc1 = acc1 + w_ref[0:16, k:k + 1] * x[k:k + 1, :]   # (16,1)*(1,BT)
    h1 = _leaky_relu(acc1)                           # (16, BT)

    # ---- fc2 + leaky_relu : (8,16) weights ---------------------------------
    acc2 = w_ref[16:24, 16:17]                       # b2 (8, 1)
    for k in range(16):
        acc2 = acc2 + w_ref[16:24, k:k + 1] * h1[k:k + 1, :]
    h2 = _leaky_relu(acc2)                           # (8, BT)

    # ---- fc3 : (1,8) weights -----------------------------------------------
    acc3 = w_ref[24:25, 8:9]                         # b3 (1, 1)
    for k in range(8):
        acc3 = acc3 + w_ref[24:25, k:k + 1] * h2[k:k + 1, :]

    # torch.where(torch.isnan(x), 0.5, x)
    o_ref[...] = jnp.where(jnp.isnan(acc3), jnp.float32(0.5), acc3)


# ---------------------------------------------------------------------------
# Parameter packing (torch layout -> one padded VMEM slab)
# ---------------------------------------------------------------------------
def pack_params(params):
    """params in torch layout: w1(16,5) b1(16,) w2(8,16) b2(8,) w3(1,8) b3(1,)."""
    w1, b1, w2, b2, w3, b3 = params
    slab = jnp.zeros((32, 128), jnp.float32)
    slab = slab.at[0:16, 0:5].set(w1.astype(jnp.float32))
    slab = slab.at[0:16, 5].set(b1.astype(jnp.float32))
    slab = slab.at[16:24, 0:16].set(w2.astype(jnp.float32))
    slab = slab.at[16:24, 16].set(b2.astype(jnp.float32))
    slab = slab.at[24:25, 0:8].set(w3.astype(jnp.float32))
    slab = slab.at[24, 8].set(b3[0].astype(jnp.float32))
    return slab


def _choose_batch_tile(B):
    """Multiple of 128, capped at BT_MAX, and keeping >=2 grid steps whenever
    the padded batch is >= 256 lanes (so both v7x TensorCores get work)."""
    bpad = _round_up(B, LANE)
    if bpad <= LANE:
        return LANE
    half = _round_up((bpad + 1) // 2, LANE)
    return min(BT_MAX, half)


# ---------------------------------------------------------------------------
# Wrappers
# ---------------------------------------------------------------------------
def net_forward_features_t(xt, params):
    """xt: (5, B) f32 batch-on-lanes features -> (1, B) f32.

    Preferred entry point: if the feature producer already emits (5, B),
    this avoids the extra HBM transpose pass entirely."""
    F, B = xt.shape
    assert F == 5, "Net expects 5 input features"
    BT = _choose_batch_tile(B)
    Bpad = _round_up(B, BT)

    xt = xt.astype(jnp.float32)
    if Bpad != B:
        xt = jnp.pad(xt, ((0, 0), (0, Bpad - B)))    # zero tail -> junk cols sliced below

    slab = pack_params(params)

    out = pl.pallas_call(
        net_kernel,
        out_shape=jax.ShapeDtypeStruct((1, Bpad), jnp.float32),
        grid_spec=pltpu.PrefetchScalarGridSpec(
            num_scalar_prefetch=0,
            grid=(Bpad // BT,),
            in_specs=[
                pl.BlockSpec((32, 128), lambda i: (0, 0)),  # weight slab, resident
                pl.BlockSpec((5, BT), lambda i: (0, i)),    # x tile (lane-dense)
            ],
            out_specs=pl.BlockSpec((1, BT), lambda i: (0, i)),
        ),
        compiler_params=pltpu.CompilerParams(
            dimension_semantics=("parallel",),
        ),
    )(slab, xt)

    return out[:, :B]                                # (1, B)


def net_forward(x, params):
    """x: (B, 5) f32 (torch layout) -> (B, 1) f32, matching the PyTorch forward.

    The transpose to batch-on-lanes happens here in the wrapper (one XLA pass);
    use net_forward_features_t directly if features are already (5, B)."""
    out_t = net_forward_features_t(jnp.transpose(x), params)
    return jnp.transpose(out_t)                      # (B, 1)


# ---------------------------------------------------------------------------
# Init (matches nn.init.xavier_uniform_ / zeros_) and pure-JAX reference
# ---------------------------------------------------------------------------
def xavier_uniform(key, out_features, in_features):
    bound = jnp.sqrt(6.0 / (in_features + out_features))
    return jax.random.uniform(
        key, (out_features, in_features), jnp.float32, minval=-bound, maxval=bound
    )


def init_params(key):
    k1, k2, k3 = jax.random.split(key, 3)
    w1 = xavier_uniform(k1, 16, 5)
    b1 = jnp.zeros((16,), jnp.float32)
    w2 = xavier_uniform(k2, 8, 16)
    b2 = jnp.zeros((8,), jnp.float32)
    w3 = xavier_uniform(k3, 1, 8)
    b3 = jnp.zeros((1,), jnp.float32)
    return w1, b1, w2, b2, w3, b3


def reference_forward(x, params):
    w1, b1, w2, b2, w3, b3 = params
    h = _leaky_relu(x @ w1.T + b1)
    h = _leaky_relu(h @ w2.T + b2)
    y = h @ w3.T + b3
    return jnp.where(jnp.isnan(y), 0.5, y)


if __name__ == "__main__":
    key = jax.random.PRNGKey(0)
    k_param, k_x1, k_x2 = jax.random.split(key, 3)

    params = init_params(k_param)

    # Small canonical check (B=8 -> single 128-lane tile)
    B = 8
    x = jax.random.normal(k_x1, (B, 5), jnp.float32)
    out = jax.block_until_ready(net_forward(x, params))
    ref = reference_forward(x, params)
    assert out.shape == (B, 1)
    assert jnp.allclose(out, ref, atol=1e-5, rtol=1e-5)

    # Multi-step grid + padded-tail + NaN-fixup check
    # (B=600 -> BT=384, Bpad=768, grid=2 "parallel" steps)
    B2 = 600
    x2 = jax.random.normal(k_x2, (B2, 5), jnp.float32)
    x2 = x2.at[0, 0].set(jnp.nan)                    # exercises isnan -> 0.5 path
    out2 = jax.block_until_ready(net_forward(x2, params))
    ref2 = reference_forward(x2, params)
    assert out2.shape == (B2, 1)
    assert jnp.allclose(out2, ref2, atol=1e-5, rtol=1e-5)
    assert not jnp.any(jnp.isnan(out2))

    print("KERNEL_OK")
</pallas_src>

<mosaic_0001>
module attributes {stable_mosaic.version = 11 : i64} {
  func.func @net_kernel(%arg0: i32, %arg1: memref<32x128xf32, #tpu.memory_space<vmem>>, %arg2: memref<5x128xf32, #tpu.memory_space<vmem>>, %arg3: memref<1x128xf32, #tpu.memory_space<vmem>>) attributes {dimension_semantics = [#tpu.dimension_semantics<parallel>], iteration_bounds = array<i64: 1>, scalar_prefetch = 0 : i64, scratch_operands = 0 : i64, tpu.core_type = #tpu.core_type<tc>, window_params = [{pipeline_mode = #tpu.pipeline_mode<synchronous>, transform_indices = @transform_0, window_bounds = array<i64: 32, 128>}, {transform_indices = @transform_1, window_bounds = array<i64: 5, 128>}, {transform_indices = @transform_2, window_bounds = array<i64: 1, 128>}]} {
    %c0 = arith.constant 0 : index
    %c0_0 = arith.constant 0 : index
    %0 = vector.load %arg2[%c0, %c0_0] : memref<5x128xf32, #tpu.memory_space<vmem>>, vector<5x128xf32>
    %c0_1 = arith.constant 0 : index
    %c5 = arith.constant 5 : index
    %1 = vector.load %arg1[%c0_1, %c5] : memref<32x128xf32, #tpu.memory_space<vmem>>, vector<16x1xf32>
    %c0_2 = arith.constant 0 : index
    %c0_3 = arith.constant 0 : index
    %2 = vector.load %arg1[%c0_2, %c0_3] : memref<32x128xf32, #tpu.memory_space<vmem>>, vector<16x1xf32>
    %3 = vector.extract_strided_slice %0 {offsets = [0, 0], sizes = [1, 128], strides = [1, 1]} : vector<5x128xf32> to vector<1x128xf32>
    %4 = vector.broadcast %2 : vector<16x1xf32> to vector<16x128xf32>
    %5 = vector.broadcast %3 : vector<1x128xf32> to vector<16x128xf32>
    %6 = arith.mulf %4, %5 : vector<16x128xf32>
    %7 = vector.broadcast %1 : vector<16x1xf32> to vector<16x128xf32>
    %8 = arith.addf %7, %6 : vector<16x128xf32>
    %c0_4 = arith.constant 0 : index
    %c1 = arith.constant 1 : index
    %9 = vector.load %arg1[%c0_4, %c1] : memref<32x128xf32, #tpu.memory_space<vmem>>, vector<16x1xf32>
    %10 = vector.extract_strided_slice %0 {offsets = [1, 0], sizes = [1, 128], strides = [1, 1]} : vector<5x128xf32> to vector<1x128xf32>
    %11 = vector.broadcast %9 : vector<16x1xf32> to vector<16x128xf32>
    %12 = vector.broadcast %10 : vector<1x128xf32> to vector<16x128xf32>
    %13 = arith.mulf %11, %12 : vector<16x128xf32>
    %14 = arith.addf %8, %13 : vector<16x128xf32>
    %c0_5 = arith.constant 0 : index
    %c2 = arith.constant 2 : index
    %15 = vector.load %arg1[%c0_5, %c2] : memref<32x128xf32, #tpu.memory_space<vmem>>, vector<16x1xf32>
    %16 = vector.extract_strided_slice %0 {offsets = [2, 0], sizes = [1, 128], strides = [1, 1]} : vector<5x128xf32> to vector<1x128xf32>
    %17 = vector.broadcast %15 : vector<16x1xf32> to vector<16x128xf32>
    %18 = vector.broadcast %16 : vector<1x128xf32> to vector<16x128xf32>
    %19 = arith.mulf %17, %18 : vector<16x128xf32>
    %20 = arith.addf %14, %19 : vector<16x128xf32>
    %c0_6 = arith.constant 0 : index
    %c3 = arith.constant 3 : index
    %21 = vector.load %arg1[%c0_6, %c3] : memref<32x128xf32, #tpu.memory_space<vmem>>, vector<16x1xf32>
    %22 = vector.extract_strided_slice %0 {offsets = [3, 0], sizes = [1, 128], strides = [1, 1]} : vector<5x128xf32> to vector<1x128xf32>
    %23 = vector.broadcast %21 : vector<16x1xf32> to vector<16x128xf32>
    %24 = vector.broadcast %22 : vector<1x128xf32> to vector<16x128xf32>
    %25 = arith.mulf %23, %24 : vector<16x128xf32>
    %26 = arith.addf %20, %25 : vector<16x128xf32>
    %c0_7 = arith.constant 0 : index
    %c4 = arith.constant 4 : index
    %27 = vector.load %arg1[%c0_7, %c4] : memref<32x128xf32, #tpu.memory_space<vmem>>, vector<16x1xf32>
    %28 = vector.extract_strided_slice %0 {offsets = [4, 0], sizes = [1, 128], strides = [1, 1]} : vector<5x128xf32> to vector<1x128xf32>
    %29 = vector.broadcast %27 : vector<16x1xf32> to vector<16x128xf32>
    %30 = vector.broadcast %28 : vector<1x128xf32> to vector<16x128xf32>
    %31 = arith.mulf %29, %30 : vector<16x128xf32>
    %32 = arith.addf %26, %31 : vector<16x128xf32>
    %cst = arith.constant 0.000000e+00 : f32
    %33 = vector.broadcast %cst : f32 to vector<16x128xf32>
    %34 = arith.cmpf oge, %32, %33 : vector<16x128xf32>
    %cst_8 = arith.constant 0.00999999977 : f32
    %35 = vector.broadcast %cst_8 : f32 to vector<16x128xf32>
    %36 = arith.mulf %35, %32 : vector<16x128xf32>
    %37 = arith.select %34, %32, %36 : vector<16x128xi1>, vector<16x128xf32>
    %c16 = arith.constant 16 : index
    %c16_9 = arith.constant 16 : index
    %38 = vector.load %arg1[%c16, %c16_9] : memref<32x128xf32, #tpu.memory_space<vmem>>, vector<8x1xf32>
    %c16_10 = arith.constant 16 : index
    %c0_11 = arith.constant 0 : index
    %39 = vector.load %arg1[%c16_10, %c0_11] : memref<32x128xf32, #tpu.memory_space<vmem>>, vector<8x1xf32>
    %40 = vector.extract_strided_slice %37 {offsets = [0, 0], sizes = [1, 128], strides = [1, 1]} : vector<16x128xf32> to vector<1x128xf32>
    %41 = vector.broadcast %39 : vector<8x1xf32> to vector<8x128xf32>
    %42 = vector.broadcast %40 : vector<1x128xf32> to vector<8x128xf32>
    %43 = arith.mulf %41, %42 : vector<8x128xf32>
    %44 = vector.broadcast %38 : vector<8x1xf32> to vector<8x128xf32>
    %45 = arith.addf %44, %43 : vector<8x128xf32>
    %c16_12 = arith.constant 16 : index
    %c1_13 = arith.constant 1 : index
    %46 = vector.load %arg1[%c16_12, %c1_13] : memref<32x128xf32, #tpu.memory_space<vmem>>, vector<8x1xf32>
    %47 = vector.extract_strided_slice %37 {offsets = [1, 0], sizes = [1, 128], strides = [1, 1]} : vector<16x128xf32> to vector<1x128xf32>
    %48 = vector.broadcast %46 : vector<8x1xf32> to vector<8x128xf32>
    %49 = vector.broadcast %47 : vector<1x128xf32> to vector<8x128xf32>
    %50 = arith.mulf %48, %49 : vector<8x128xf32>
    %51 = arith.addf %45, %50 : vector<8x128xf32>
    %c16_14 = arith.constant 16 : index
    %c2_15 = arith.constant 2 : index
    %52 = vector.load %arg1[%c16_14, %c2_15] : memref<32x128xf32, #tpu.memory_space<vmem>>, vector<8x1xf32>
    %53 = vector.extract_strided_slice %37 {offsets = [2, 0], sizes = [1, 128], strides = [1, 1]} : vector<16x128xf32> to vector<1x128xf32>
    %54 = vector.broadcast %52 : vector<8x1xf32> to vector<8x128xf32>
    %55 = vector.broadcast %53 : vector<1x128xf32> to vector<8x128xf32>
    %56 = arith.mulf %54, %55 : vector<8x128xf32>
    %57 = arith.addf %51, %56 : vector<8x128xf32>
    %c16_16 = arith.constant 16 : index
    %c3_17 = arith.constant 3 : index
    %58 = vector.load %arg1[%c16_16, %c3_17] : memref<32x128xf32, #tpu.memory_space<vmem>>, vector<8x1xf32>
    %59 = vector.extract_strided_slice %37 {offsets = [3, 0], sizes = [1, 128], strides = [1, 1]} : vector<16x128xf32> to vector<1x128xf32>
    %60 = vector.broadcast %58 : vector<8x1xf32> to vector<8x128xf32>
    %61 = vector.broadcast %59 : vector<1x128xf32> to vector<8x128xf32>
    %62 = arith.mulf %60, %61 : vector<8x128xf32>
    %63 = arith.addf %57, %62 : vector<8x128xf32>
    %c16_18 = arith.constant 16 : index
    %c4_19 = arith.constant 4 : index
    %64 = vector.load %arg1[%c16_18, %c4_19] : memref<32x128xf32, #tpu.memory_space<vmem>>, vector<8x1xf32>
    %65 = vector.extract_strided_slice %37 {offsets = [4, 0], sizes = [1, 128], strides = [1, 1]} : vector<16x128xf32> to vector<1x128xf32>
    %66 = vector.broadcast %64 : vector<8x1xf32> to vector<8x128xf32>
    %67 = vector.broadcast %65 : vector<1x128xf32> to vector<8x128xf32>
    %68 = arith.mulf %66, %67 : vector<8x128xf32>
    %69 = arith.addf %63, %68 : vector<8x128xf32>
    %c16_20 = arith.constant 16 : index
    %c5_21 = arith.constant 5 : index
    %70 = vector.load %arg1[%c16_20, %c5_21] : memref<32x128xf32, #tpu.memory_space<vmem>>, vector<8x1xf32>
    %71 = vector.extract_strided_slice %37 {offsets = [5, 0], sizes = [1, 128], strides = [1, 1]} : vector<16x128xf32> to vector<1x128xf32>
    %72 = vector.broadcast %70 : vector<8x1xf32> to vector<8x128xf32>
    %73 = vector.broadcast %71 : vector<1x128xf32> to vector<8x128xf32>
    %74 = arith.mulf %72, %73 : vector<8x128xf32>
    %75 = arith.addf %69, %74 : vector<8x128xf32>
    %c16_22 = arith.constant 16 : index
    %c6 = arith.constant 6 : index
    %76 = vector.load %arg1[%c16_22, %c6] : memref<32x128xf32, #tpu.memory_space<vmem>>, vector<8x1xf32>
    %77 = vector.extract_strided_slice %37 {offsets = [6, 0], sizes = [1, 128], strides = [1, 1]} : vector<16x128xf32> to vector<1x128xf32>
    %78 = vector.broadcast %76 : vector<8x1xf32> to vector<8x128xf32>
    %79 = vector.broadcast %77 : vector<1x128xf32> to vector<8x128xf32>
    %80 = arith.mulf %78, %79 : vector<8x128xf32>
    %81 = arith.addf %75, %80 : vector<8x128xf32>
    %c16_23 = arith.constant 16 : index
    %c7 = arith.constant 7 : index
    %82 = vector.load %arg1[%c16_23, %c7] : memref<32x128xf32, #tpu.memory_space<vmem>>, vector<8x1xf32>
    %83 = vector.extract_strided_slice %37 {offsets = [7, 0], sizes = [1, 128], strides = [1, 1]} : vector<16x128xf32> to vector<1x128xf32>
    %84 = vector.broadcast %82 : vector<8x1xf32> to vector<8x128xf32>
    %85 = vector.broadcast %83 : vector<1x128xf32> to vector<8x128xf32>
    %86 = arith.mulf %84, %85 : vector<8x128xf32>
    %87 = arith.addf %81, %86 : vector<8x128xf32>
    %c16_24 = arith.constant 16 : index
    %c8 = arith.constant 8 : index
    %88 = vector.load %arg1[%c16_24, %c8] : memref<32x128xf32, #tpu.memory_space<vmem>>, vector<8x1xf32>
    %89 = vector.extract_strided_slice %37 {offsets = [8, 0], sizes = [1, 128], strides = [1, 1]} : vector<16x128xf32> to vector<1x128xf32>
    %90 = vector.broadcast %88 : vector<8x1xf32> to vector<8x128xf32>
    %91 = vector.broadcast %89 : vector<1x128xf32> to vector<8x128xf32>
    %92 = arith.mulf %90, %91 : vector<8x128xf32>
    %93 = arith.addf %87, %92 : vector<8x128xf32>
    %c16_25 = arith.constant 16 : index
    %c9 = arith.constant 9 : index
    %94 = vector.load %arg1[%c16_25, %c9] : memref<32x128xf32, #tpu.memory_space<vmem>>, vector<8x1xf32>
    %95 = vector.extract_strided_slice %37 {offsets = [9, 0], sizes = [1, 128], strides = [1, 1]} : vector<16x128xf32> to vector<1x128xf32>
    %96 = vector.broadcast %94 : vector<8x1xf32> to vector<8x128xf32>
    %97 = vector.broadcast %95 : vector<1x128xf32> to vector<8x128xf32>
    %98 = arith.mulf %96, %97 : vector<8x128xf32>
    %99 = arith.addf %93, %98 : vector<8x128xf32>
    %c16_26 = arith.constant 16 : index
    %c10 = arith.constant 10 : index
    %100 = vector.load %arg1[%c16_26, %c10] : memref<32x128xf32, #tpu.memory_space<vmem>>, vector<8x1xf32>
    %101 = vector.extract_strided_slice %37 {offsets = [10, 0], sizes = [1, 128], strides = [1, 1]} : vector<16x128xf32> to vector<1x128xf32>
    %102 = vector.broadcast %100 : vector<8x1xf32> to vector<8x128xf32>
    %103 = vector.broadcast %101 : vector<1x128xf32> to vector<8x128xf32>
    %104 = arith.mulf %102, %103 : vector<8x128xf32>
    %105 = arith.addf %99, %104 : vector<8x128xf32>
    %c16_27 = arith.constant 16 : index
    %c11 = arith.constant 11 : index
    %106 = vector.load %arg1[%c16_27, %c11] : memref<32x128xf32, #tpu.memory_space<vmem>>, vector<8x1xf32>
    %107 = vector.extract_strided_slice %37 {offsets = [11, 0], sizes = [1, 128], strides = [1, 1]} : vector<16x128xf32> to vector<1x128xf32>
    %108 = vector.broadcast %106 : vector<8x1xf32> to vector<8x128xf32>
    %109 = vector.broadcast %107 : vector<1x128xf32> to vector<8x128xf32>
    %110 = arith.mulf %108, %109 : vector<8x128xf32>
    %111 = arith.addf %105, %110 : vector<8x128xf32>
    %c16_28 = arith.constant 16 : index
    %c12 = arith.constant 12 : index
    %112 = vector.load %arg1[%c16_28, %c12] : memref<32x128xf32, #tpu.memory_space<vmem>>, vector<8x1xf32>
    %113 = vector.extract_strided_slice %37 {offsets = [12, 0], sizes = [1, 128], strides = [1, 1]} : vector<16x128xf32> to vector<1x128xf32>
    %114 = vector.broadcast %112 : vector<8x1xf32> to vector<8x128xf32>
    %115 = vector.broadcast %113 : vector<1x128xf32> to vector<8x128xf32>
    %116 = arith.mulf %114, %115 : vector<8x128xf32>
    %117 = arith.addf %111, %116 : vector<8x128xf32>
    %c16_29 = arith.constant 16 : index
    %c13 = arith.constant 13 : index
    %118 = vector.load %arg1[%c16_29, %c13] : memref<32x128xf32, #tpu.memory_space<vmem>>, vector<8x1xf32>
    %119 = vector.extract_strided_slice %37 {offsets = [13, 0], sizes = [1, 128], strides = [1, 1]} : vector<16x128xf32> to vector<1x128xf32>
    %120 = vector.broadcast %118 : vector<8x1xf32> to vector<8x128xf32>
    %121 = vector.broadcast %119 : vector<1x128xf32> to vector<8x128xf32>
    %122 = arith.mulf %120, %121 : vector<8x128xf32>
    %123 = arith.addf %117, %122 : vector<8x128xf32>
    %c16_30 = arith.constant 16 : index
    %c14 = arith.constant 14 : index
    %124 = vector.load %arg1[%c16_30, %c14] : memref<32x128xf32, #tpu.memory_space<vmem>>, vector<8x1xf32>
    %125 = vector.extract_strided_slice %37 {offsets = [14, 0], sizes = [1, 128], strides = [1, 1]} : vector<16x128xf32> to vector<1x128xf32>
    %126 = vector.broadcast %124 : vector<8x1xf32> to vector<8x128xf32>
    %127 = vector.broadcast %125 : vector<1x128xf32> to vector<8x128xf32>
    %128 = arith.mulf %126, %127 : vector<8x128xf32>
    %129 = arith.addf %123, %128 : vector<8x128xf32>
    %c16_31 = arith.constant 16 : index
    %c15 = arith.constant 15 : index
    %130 = vector.load %arg1[%c16_31, %c15] : memref<32x128xf32, #tpu.memory_space<vmem>>, vector<8x1xf32>
    %131 = vector.extract_strided_slice %37 {offsets = [15, 0], sizes = [1, 128], strides = [1, 1]} : vector<16x128xf32> to vector<1x128xf32>
    %132 = vector.broadcast %130 : vector<8x1xf32> to vector<8x128xf32>
    %133 = vector.broadcast %131 : vector<1x128xf32> to vector<8x128xf32>
    %134 = arith.mulf %132, %133 : vector<8x128xf32>
    %135 = arith.addf %129, %134 : vector<8x128xf32>
    %cst_32 = arith.constant 0.000000e+00 : f32
    %136 = vector.broadcast %cst_32 : f32 to vector<8x128xf32>
    %137 = arith.cmpf oge, %135, %136 : vector<8x128xf32>
    %cst_33 = arith.constant 0.00999999977 : f32
    %138 = vector.broadcast %cst_33 : f32 to vector<8x128xf32>
    %139 = arith.mulf %138, %135 : vector<8x128xf32>
    %140 = arith.select %137, %135, %139 : vector<8x128xi1>, vector<8x128xf32>
    %c24 = arith.constant 24 : index
    %c8_34 = arith.constant 8 : index
    %141 = vector.load %arg1[%c24, %c8_34] : memref<32x128xf32, #tpu.memory_space<vmem>>, vector<1x1xf32>
    %c24_35 = arith.constant 24 : index
    %c0_36 = arith.constant 0 : index
    %142 = vector.load %arg1[%c24_35, %c0_36] : memref<32x128xf32, #tpu.memory_space<vmem>>, vector<1x1xf32>
    %143 = vector.extract_strided_slice %140 {offsets = [0, 0], sizes = [1, 128], strides = [1, 1]} : vector<8x128xf32> to vector<1x128xf32>
    %144 = vector.broadcast %142 : vector<1x1xf32> to vector<1x128xf32>
    %145 = arith.mulf %144, %143 : vector<1x128xf32>
    %146 = vector.broadcast %141 : vector<1x1xf32> to vector<1x128xf32>
    %147 = arith.addf %146, %145 : vector<1x128xf32>
    %c24_37 = arith.constant 24 : index
    %c1_38 = arith.constant 1 : index
    %148 = vector.load %arg1[%c24_37, %c1_38] : memref<32x128xf32, #tpu.memory_space<vmem>>, vector<1x1xf32>
    %149 = vector.extract_strided_slice %140 {offsets = [1, 0], sizes = [1, 128], strides = [1, 1]} : vector<8x128xf32> to vector<1x128xf32>
    %150 = vector.broadcast %148 : vector<1x1xf32> to vector<1x128xf32>
    %151 = arith.mulf %150, %149 : vector<1x128xf32>
    %152 = arith.addf %147, %151 : vector<1x128xf32>
    %c24_39 = arith.constant 24 : index
    %c2_40 = arith.constant 2 : index
    %153 = vector.load %arg1[%c24_39, %c2_40] : memref<32x128xf32, #tpu.memory_space<vmem>>, vector<1x1xf32>
    %154 = vector.extract_strided_slice %140 {offsets = [2, 0], sizes = [1, 128], strides = [1, 1]} : vector<8x128xf32> to vector<1x128xf32>
    %155 = vector.broadcast %153 : vector<1x1xf32> to vector<1x128xf32>
    %156 = arith.mulf %155, %154 : vector<1x128xf32>
    %157 = arith.addf %152, %156 : vector<1x128xf32>
    %c24_41 = arith.constant 24 : index
    %c3_42 = arith.constant 3 : index
    %158 = vector.load %arg1[%c24_41, %c3_42] : memref<32x128xf32, #tpu.memory_space<vmem>>, vector<1x1xf32>
    %159 = vector.extract_strided_slice %140 {offsets = [3, 0], sizes = [1, 128], strides = [1, 1]} : vector<8x128xf32> to vector<1x128xf32>
    %160 = vector.broadcast %158 : vector<1x1xf32> to vector<1x128xf32>
    %161 = arith.mulf %160, %159 : vector<1x128xf32>
    %162 = arith.addf %157, %161 : vector<1x128xf32>
    %c24_43 = arith.constant 24 : index
    %c4_44 = arith.constant 4 : index
    %163 = vector.load %arg1[%c24_43, %c4_44] : memref<32x128xf32, #tpu.memory_space<vmem>>, vector<1x1xf32>
    %164 = vector.extract_strided_slice %140 {offsets = [4, 0], sizes = [1, 128], strides = [1, 1]} : vector<8x128xf32> to vector<1x128xf32>
    %165 = vector.broadcast %163 : vector<1x1xf32> to vector<1x128xf32>
    %166 = arith.mulf %165, %164 : vector<1x128xf32>
    %167 = arith.addf %162, %166 : vector<1x128xf32>
    %c24_45 = arith.constant 24 : index
    %c5_46 = arith.constant 5 : index
    %168 = vector.load %arg1[%c24_45, %c5_46] : memref<32x128xf32, #tpu.memory_space<vmem>>, vector<1x1xf32>
    %169 = vector.extract_strided_slice %140 {offsets = [5, 0], sizes = [1, 128], strides = [1, 1]} : vector<8x128xf32> to vector<1x128xf32>
    %170 = vector.broadcast %168 : vector<1x1xf32> to vector<1x128xf32>
    %171 = arith.mulf %170, %169 : vector<1x128xf32>
    %172 = arith.addf %167, %171 : vector<1x128xf32>
    %c24_47 = arith.constant 24 : index
    %c6_48 = arith.constant 6 : index
    %173 = vector.load %arg1[%c24_47, %c6_48] : memref<32x128xf32, #tpu.memory_space<vmem>>, vector<1x1xf32>
    %174 = vector.extract_strided_slice %140 {offsets = [6, 0], sizes = [1, 128], strides = [1, 1]} : vector<8x128xf32> to vector<1x128xf32>
    %175 = vector.broadcast %173 : vector<1x1xf32> to vector<1x128xf32>
    %176 = arith.mulf %175, %174 : vector<1x128xf32>
    %177 = arith.addf %172, %176 : vector<1x128xf32>
    %c24_49 = arith.constant 24 : index
    %c7_50 = arith.constant 7 : index
    %178 = vector.load %arg1[%c24_49, %c7_50] : memref<32x128xf32, #tpu.memory_space<vmem>>, vector<1x1xf32>
    %179 = vector.extract_strided_slice %140 {offsets = [7, 0], sizes = [1, 128], strides = [1, 1]} : vector<8x128xf32> to vector<1x128xf32>
    %180 = vector.broadcast %178 : vector<1x1xf32> to vector<1x128xf32>
    %181 = arith.mulf %180, %179 : vector<1x128xf32>
    %182 = arith.addf %177, %181 : vector<1x128xf32>
    %183 = arith.cmpf one, %182, %182 : vector<1x128xf32>
    %cst_51 = arith.constant 5.000000e-01 : f32
    %184 = vector.broadcast %cst_51 : f32 to vector<1x128xf32>
    %185 = arith.select %183, %184, %182 : vector<1x128xi1>, vector<1x128xf32>
    %c0_52 = arith.constant 0 : index
    %c0_53 = arith.constant 0 : index
    %186 = vector.load %arg3[%c0_52, %c0_53] : memref<1x128xf32, #tpu.memory_space<vmem>>, vector<1x128xf32>
    tpu.vector_store %arg3[%c0_52, %c0_53], %185 {strides = array<i32>} : memref<1x128xf32, #tpu.memory_space<vmem>>, vector<1x128xf32>,
    return
  }
  func.func @transform_0(%arg0: i32) -> (i32, i32) {
    %c0_i32 = arith.constant 0 : i32
    %c0_i32_0 = arith.constant 0 : i32
    %c0_i32_1 = arith.constant 0 : i32
    return %c0_i32, %c0_i32_0 : i32, i32
  }
  func.func @transform_1(%arg0: i32) -> (i32, i32) {
    %c0_i32 = arith.constant 0 : i32
    %c0_i32_0 = arith.constant 0 : i32
    return %c0_i32, %arg0 : i32, i32
  }
  func.func @transform_2(%arg0: i32) -> (i32, i32) {
    %c0_i32 = arith.constant 0 : i32
    %c0_i32_0 = arith.constant 0 : i32
    return %c0_i32, %arg0 : i32, i32
  }
}

</mosaic_0001>

<llo_original>
// kernel: tpu_custom_call.1
$region0: #{tpu_custom_call.1}
  #allocation0 [shape = 'u32[]', space=smem, size = 0x4, offset = 0x4, fixed_abs, tag = 'smem constant byte address 0x4 - core index']
  #allocation1 [shape = 'u32[144,128]{1,0:T(1,128)}', space=vmem, size = 0x12000, scoped, tag = 'internal scratch']
  %s0 = inlined_call_operand.hbm [shape: f32[32,128], index: 0, kind: input, shape index: {}]
  %s1 = inlined_call_operand.hbm [shape: f32[5,128], index: 1, kind: input, shape index: {}]
  %s2 = inlined_call_operand.hbm [shape: f32[1,128], index: 2, kind: output, shape index: {}]
  %s3 = sld [smem:[#allocation0]]
  $region26: #{tpu_custom_call.1} parent=0
    _
  %s5 = ssub.s32 1, %s3
  %s6 = scalar_select 0, %s5, %s3
  $region1: #{tpu_custom_call.1} parent=0
    #allocation2 [shape = 'u8[16384]{0}', space=vmem, size = 0x4000, scoped, tag = 'input window, operand 0, single buffered']
    #allocation3 [shape = 's32[1]{0}', space=sflag, size = 0x4, scoped, tag = 'scoped memory for tpu_custom_call.1']
    #allocation4 [shape = 's32[1]{0}', space=sflag, size = 0x4, scoped, tag = 'scoped memory for tpu_custom_call.1']
    #allocation5 [shape = 'u8[4096]{0}', space=vmem, size = 0x1000, scoped, tag = 'input window, operand 1, single buffered']
    #allocation6 [shape = 's32[1]{0}', space=sflag, size = 0x4, scoped, tag = 'scoped memory for tpu_custom_call.1']
    #allocation7 [shape = 'u8[512]{0}', space=vmem, size = 0x400, scoped, tag = 'output window, operand 0, single buffered']
    %7 = vsyncpa [#allocation3], 0
    %8 = vsyncpa [#allocation6], 0
    %9 = vsyncpa [#allocation4], 0
    // Predicated region
    $region2: #{tpu_custom_call.1} parent=1 // pred_check
      _
    $region3: #{tpu_custom_call.1} parent=1 // pred_check_branch
      %11 = sbr.rel (0) target = $region5
    $region4: #{tpu_custom_call.1} parent=1 // pred_region
      %s13 = ssub.s32 512, 512
      %14 = vsyncadd [#allocation3], %s13
      %s15 = sshll.u32 [#allocation2], 4
      %s16 = int_to_ptr.vmem [resolvable:$true] %s15
      %21 = dma.hbm_to_vmem [thread:$0]  %s0, 512, %s16, [#allocation3], 128, 128, 8
    $region5: #{tpu_custom_call.1} parent=1 // pred_fallthru
      _
    // Predicated region
    $region6: #{tpu_custom_call.1} parent=1 // pred_check
      _
    $region7: #{tpu_custom_call.1} parent=1 // pred_check_branch
      %23 = sbr.rel (0) target = $region9
    $region8: #{tpu_custom_call.1} parent=1 // pred_region
      %s25 = ssub.s32 128, 128
      %26 = vsyncadd [#allocation6], %s25
      %s28 = sshll.u32 [#allocation5], 4
      %s29 = int_to_ptr.vmem [resolvable:$true] %s28
      %31 = dma.hbm_to_vmem [thread:$0]  %s1, 128, %s29, [#allocation6]
    $region9: #{tpu_custom_call.1} parent=1 // pred_fallthru
      _
    // Predicated region
    $region10: #{tpu_custom_call.1} parent=1 // pred_check
      _
    $region11: #{tpu_custom_call.1} parent=1 // pred_check_branch
      %33 = sbr.rel (0) target = $region13
    $region12: #{tpu_custom_call.1} parent=1 // pred_region
      %34 = dma.done [#allocation3], 512
    $region13: #{tpu_custom_call.1} parent=1 // pred_fallthru
      _
    // Predicated region
    $region14: #{tpu_custom_call.1} parent=1 // pred_check
      _
    $region15: #{tpu_custom_call.1} parent=1 // pred_check_branch
      %36 = sbr.rel (0) target = $region17
    $region16: #{tpu_custom_call.1} parent=1 // pred_region
      %37 = dma.done [#allocation6], 128
    $region17: #{tpu_custom_call.1} parent=1 // pred_fallthru
      _
    %v38 = vld [vmem:[#allocation5] sm:$0x1f]
    %v39 = vld [vmem:[#allocation2] sm:$0xff]
    %v40 = vld [vmem:[#allocation2 + $0x8] sm:$0xff]
    %42 = vset.pattern.permute.xlu0 0
    %43 = vperm.xlu0 %42, %v39
    %v44 = vpop.permute.xlu0 %43
    %47 = vset.pattern.permute.xlu0 0
    %48 = vperm.xlu0 %47, %v40
    %v49 = vpop.permute.xlu0 %48
    %v51 = vlaneseq
    %v52 = vshrl.u32 %v51, 7
    %v53 = vsub.s32 0, %v52
    %v54 = vrot.slane %v38, %v53
    %v55 = vmul.f32 %v44, %v54
    %v56 = vmul.f32 %v49, %v54
    %57 = vset.pattern.permute.xlu0 5
    %58 = vperm.xlu0 %57, %v39
    %v59 = vpop.permute.xlu0 %58
    %61 = vset.pattern.permute.xlu0 5
    %62 = vperm.xlu0 %61, %v40
    %v63 = vpop.permute.xlu0 %62
    %v65 = vadd.f32 %v59, %v55
    %v66 = vadd.f32 %v63, %v56
    %67 = vset.pattern.permute.xlu0 1
    %68 = vperm.xlu0 %67, %v39
    %v69 = vpop.permute.xlu0 %68
    %71 = vset.pattern.permute.xlu0 1
    %72 = vperm.xlu0 %71, %v40
    %v73 = vpop.permute.xlu0 %72
    %v75 = vlaneseq
    %v76 = vshrl.u32 %v75, 7
    %v77 = vsub.s32 1, %v76
    %v78 = vrot.slane %v38, %v77
    %v79 = vmul.f32 %v69, %v78
    %v80 = vmul.f32 %v73, %v78
    %v81 = vadd.f32 %v65, %v79
    %v82 = vadd.f32 %v66, %v80
    %83 = vset.pattern.permute.xlu0 2
    %84 = vperm.xlu0 %83, %v39
    %v85 = vpop.permute.xlu0 %84
    %87 = vset.pattern.permute.xlu0 2
    %88 = vperm.xlu0 %87, %v40
    %v89 = vpop.permute.xlu0 %88
    %v91 = vlaneseq
    %v92 = vshrl.u32 %v91, 7
    %v93 = vsub.s32 2, %v92
    %v94 = vrot.slane %v38, %v93
    %v95 = vmul.f32 %v85, %v94
    %v96 = vmul.f32 %v89, %v94
    %v97 = vadd.f32 %v81, %v95
    %v98 = vadd.f32 %v82, %v96
    %99 = vset.pattern.permute.xlu0 3
    %100 = vperm.xlu0 %99, %v39
    %v101 = vpop.permute.xlu0 %100
    %103 = vset.pattern.permute.xlu0 3
    %104 = vperm.xlu0 %103, %v40
    %v105 = vpop.permute.xlu0 %104
    %v107 = vlaneseq
    %v108 = vshrl.u32 %v107, 7
    %v109 = vsub.s32 3, %v108
    %v110 = vrot.slane %v38, %v109
    %v111 = vmul.f32 %v101, %v110
    %v112 = vmul.f32 %v105, %v110
    %v113 = vadd.f32 %v97, %v111
    %v114 = vadd.f32 %v98, %v112
    %115 = vset.pattern.permute.xlu0 4
    %116 = vperm.xlu0 %115, %v39
    %v117 = vpop.permute.xlu0 %116
    %119 = vset.pattern.permute.xlu0 4
    %120 = vperm.xlu0 %119, %v40
    %v121 = vpop.permute.xlu0 %120
    %v123 = vlaneseq
    %v124 = vshrl.u32 %v123, 7
    %v125 = vsub.s32 4, %v124
    %v126 = vrot.slane %v38, %v125
    %v127 = vmul.f32 %v117, %v126
    %v128 = vmul.f32 %v121, %v126
    %v129 = vadd.f32 %v113, %v127
    %v130 = vadd.f32 %v114, %v128
    %vm131 = vcmp.ge.f32.partialorder %v129, 0.0
    %vm132 = vcmp.ge.f32.partialorder %v130, 0.0
    %v133 = vmul.f32 %v129, 0.01
    %v134 = vmul.f32 %v130, 0.01
    %v135 = vsel %vm131, %v129, %v133
    %v136 = vsel %vm132, %v130, %v134
    %v137 = vld [vmem:[#allocation2 + $0x10] sm:$0xff]
    %139 = vset.pattern.permute.xlu0 0
    %140 = vperm.xlu0 %139, %v137
    %v141 = vpop.permute.xlu0 %140
    %v143 = vlaneseq
    %v144 = vshrl.u32 %v143, 7
    %v145 = vsub.s32 0, %v144
    %v146 = vrot.slane %v135, %v145
    %v147 = vmul.f32 %v141, %v146
    %148 = vset.pattern.permute.xlu0 16
    %149 = vperm.xlu0 %148, %v137
    %v150 = vpop.permute.xlu0 %149
    %v152 = vadd.f32 %v150, %v147
    %153 = vset.pattern.permute.xlu0 1
    %154 = vperm.xlu0 %153, %v137
    %v155 = vpop.permute.xlu0 %154
    %v157 = vlaneseq
    %v158 = vshrl.u32 %v157, 7
    %v159 = vsub.s32 1, %v158
    %v160 = vrot.slane %v135, %v159
    %v161 = vmul.f32 %v155, %v160
    %v162 = vadd.f32 %v152, %v161
    %163 = vset.pattern.permute.xlu0 2
    %164 = vperm.xlu0 %163, %v137
    %v165 = vpop.permute.xlu0 %164
    %v167 = vlaneseq
    %v168 = vshrl.u32 %v167, 7
    %v169 = vsub.s32 2, %v168
    %v170 = vrot.slane %v135, %v169
    %v171 = vmul.f32 %v165, %v170
    %v172 = vadd.f32 %v162, %v171
    %173 = vset.pattern.permute.xlu0 3
    %174 = vperm.xlu0 %173, %v137
    %v175 = vpop.permute.xlu0 %174
    %v177 = vlaneseq
    %v178 = vshrl.u32 %v177, 7
    %v179 = vsub.s32 3, %v178
    %v180 = vrot.slane %v135, %v179
    %v181 = vmul.f32 %v175, %v180
    %v182 = vadd.f32 %v172, %v181
    %183 = vset.pattern.permute.xlu0 4
    %184 = vperm.xlu0 %183, %v137
    %v185 = vpop.permute.xlu0 %184
    %v187 = vlaneseq
    %v188 = vshrl.u32 %v187, 7
    %v189 = vsub.s32 4, %v188
    %v190 = vrot.slane %v135, %v189
    %v191 = vmul.f32 %v185, %v190
    %v192 = vadd.f32 %v182, %v191
    %193 = vset.pattern.permute.xlu0 5
    %194 = vperm.xlu0 %193, %v137
    %v195 = vpop.permute.xlu0 %194
    %v197 = vlaneseq
    %v198 = vshrl.u32 %v197, 7
    %v199 = vsub.s32 5, %v198
    %v200 = vrot.slane %v135, %v199
    %v201 = vmul.f32 %v195, %v200
    %v202 = vadd.f32 %v192, %v201
    %203 = vset.pattern.permute.xlu0 6
    %204 = vperm.xlu0 %203, %v137
    %v205 = vpop.permute.xlu0 %204
    %v207 = vlaneseq
    %v208 = vshrl.u32 %v207, 7
    %v209 = vsub.s32 6, %v208
    %v210 = vrot.slane %v135, %v209
    %v211 = vmul.f32 %v205, %v210
    %v212 = vadd.f32 %v202, %v211
    %213 = vset.pattern.permute.xlu0 7
    %214 = vperm.xlu0 %213, %v137
    %v215 = vpop.permute.xlu0 %214
    %v217 = vlaneseq
    %v218 = vshrl.u32 %v217, 7
    %v219 = vsub.s32 7, %v218
    %v220 = vrot.slane %v135, %v219
    %v221 = vmul.f32 %v215, %v220
    %v222 = vadd.f32 %v212, %v221
    %223 = vset.pattern.permute.xlu0 8
    %224 = vperm.xlu0 %223, %v137
    %v225 = vpop.permute.xlu0 %224
    %v227 = vlaneseq
    %v228 = vshrl.u32 %v227, 7
    %v229 = vsub.s32 0, %v228
    %v230 = vrot.slane %v136, %v229
    %v231 = vmul.f32 %v225, %v230
    %v232 = vadd.f32 %v222, %v231
    %233 = vset.pattern.permute.xlu0 9
    %234 = vperm.xlu0 %233, %v137
    %v235 = vpop.permute.xlu0 %234
    %v237 = vlaneseq
    %v238 = vshrl.u32 %v237, 7
    %v239 = vsub.s32 1, %v238
    %v240 = vrot.slane %v136, %v239
    %v241 = vmul.f32 %v235, %v240
    %v242 = vadd.f32 %v232, %v241
    %243 = vset.pattern.permute.xlu0 10
    %244 = vperm.xlu0 %243, %v137
    %v245 = vpop.permute.xlu0 %244
    %v247 = vlaneseq
    %v248 = vshrl.u32 %v247, 7
    %v249 = vsub.s32 2, %v248
    %v250 = vrot.slane %v136, %v249
    %v251 = vmul.f32 %v245, %v250
    %v252 = vadd.f32 %v242, %v251
    %253 = vset.pattern.permute.xlu0 11
    %254 = vperm.xlu0 %253, %v137
    %v255 = vpop.permute.xlu0 %254
    %v257 = vlaneseq
    %v258 = vshrl.u32 %v257, 7
    %v259 = vsub.s32 3, %v258
    %v260 = vrot.slane %v136, %v259
    %v261 = vmul.f32 %v255, %v260
    %v262 = vadd.f32 %v252, %v261
    %263 = vset.pattern.permute.xlu0 12
    %264 = vperm.xlu0 %263, %v137
    %v265 = vpop.permute.xlu0 %264
    %v267 = vlaneseq
    %v268 = vshrl.u32 %v267, 7
    %v269 = vsub.s32 4, %v268
    %v270 = vrot.slane %v136, %v269
    %v271 = vmul.f32 %v265, %v270
    %v272 = vadd.f32 %v262, %v271
    %273 = vset.pattern.permute.xlu0 13
    %274 = vperm.xlu0 %273, %v137
    %v275 = vpop.permute.xlu0 %274
    %v277 = vlaneseq
    %v278 = vshrl.u32 %v277, 7
    %v279 = vsub.s32 5, %v278
    %v280 = vrot.slane %v136, %v279
    %v281 = vmul.f32 %v275, %v280
    %v282 = vadd.f32 %v272, %v281
    %283 = vset.pattern.permute.xlu0 14
    %284 = vperm.xlu0 %283, %v137
    %v285 = vpop.permute.xlu0 %284
    %v287 = vlaneseq
    %v288 = vshrl.u32 %v287, 7
    %v289 = vsub.s32 6, %v288
    %v290 = vrot.slane %v136, %v289
    %v291 = vmul.f32 %v285, %v290
    %v292 = vadd.f32 %v282, %v291
    %293 = vset.pattern.permute.xlu0 15
    %294 = vperm.xlu0 %293, %v137
    %v295 = vpop.permute.xlu0 %294
    %v297 = vlaneseq
    %v298 = vshrl.u32 %v297, 7
    %v299 = vsub.s32 7, %v298
    %v300 = vrot.slane %v136, %v299
    %v301 = vmul.f32 %v295, %v300
    %v302 = vadd.f32 %v292, %v301
    %vm303 = vcmp.ge.f32.partialorder %v302, 0.0
    %v304 = vmul.f32 %v302, 0.01
    %v305 = vsel %vm303, %v302, %v304
    %v306 = vld [vmem:[#allocation2 + $0x18] sm:$0x1]
    %308 = vset.pattern.permute.xlu0 0
    %309 = vperm.xlu0 %308, %v306
    %v310 = vpop.permute.xlu0 %309
    %v312 = vmul.f32 %v310, %v305
    %313 = vset.pattern.permute.xlu0 8
    %314 = vperm.xlu0 %313, %v306
    %v315 = vpop.permute.xlu0 %314
    %v317 = vadd.f32 %v315, %v312
    %318 = vset.pattern.permute.xlu0 1
    %319 = vperm.xlu0 %318, %v306
    %v320 = vpop.permute.xlu0 %319
    %v323 = vrot.slane %v305, 1
    %v325 = vmul.f32 %v320, %v323
    %v326 = vadd.f32 %v317, %v325
    %327 = vset.pattern.permute.xlu0 2
    %328 = vperm.xlu0 %327, %v306
    %v329 = vpop.permute.xlu0 %328
    %v331 = vrot.slane %v305, 2
    %v333 = vmul.f32 %v329, %v331
    %v334 = vadd.f32 %v326, %v333
    %335 = vset.pattern.permute.xlu0 3
    %336 = vperm.xlu0 %335, %v306
    %v337 = vpop.permute.xlu0 %336
    %v339 = vrot.slane %v305, 3
    %v341 = vmul.f32 %v337, %v339
    %v342 = vadd.f32 %v334, %v341
    %343 = vset.pattern.permute.xlu0 4
    %344 = vperm.xlu0 %343, %v306
    %v345 = vpop.permute.xlu0 %344
    %v347 = vrot.slane %v305, 4
    %v349 = vmul.f32 %v345, %v347
    %v350 = vadd.f32 %v342, %v349
    %351 = vset.pattern.permute.xlu0 5
    %352 = vperm.xlu0 %351, %v306
    %v353 = vpop.permute.xlu0 %352
    %v355 = vrot.slane %v305, 5
    %v357 = vmul.f32 %v353, %v355
    %v358 = vadd.f32 %v350, %v357
    %359 = vset.pattern.permute.xlu0 6
    %360 = vperm.xlu0 %359, %v306
    %v361 = vpop.permute.xlu0 %360
    %v363 = vrot.slane %v305, 6
    %v365 = vmul.f32 %v361, %v363
    %v366 = vadd.f32 %v358, %v365
    %367 = vset.pattern.permute.xlu0 7
    %368 = vperm.xlu0 %367, %v306
    %v369 = vpop.permute.xlu0 %368
    %v371 = vrot.slane %v305, 7
    %v373 = vmul.f32 %v369, %v371
    %v374 = vadd.f32 %v366, %v373
    %vm375 = vcmp.ne.f32.partialorder %v374, %v374
    %v376 = vsel %vm375, 0.5, %v374
    %377 = vst [vmem:[#allocation7] sm:$0x1] %v376
    // Predicated region
    $region18: #{tpu_custom_call.1} parent=1 // pred_check
      _
    $region19: #{tpu_custom_call.1} parent=1 // pred_check_branch
      %379 = sbr.rel (0) target = $region21
    $region20: #{tpu_custom_call.1} parent=1 // pred_region
      %s381 = ssub.s32 16, 16
      %382 = vsyncadd [#allocation4], %s381
      %s384 = sshll.u32 [#allocation7], 4
      %s385 = int_to_ptr.vmem [resolvable:$true] %s384
      %387 = dma.vmem_to_hbm [thread:$0]  %s385, 16, %s2, [#allocation4]
    $region21: #{tpu_custom_call.1} parent=1 // pred_fallthru
      _
    // Predicated region
    $region22: #{tpu_custom_call.1} parent=1 // pred_check
      _
    $region23: #{tpu_custom_call.1} parent=1 // pred_check_branch
      %389 = sbr.rel (0) target = $region25
    $region24: #{tpu_custom_call.1} parent=1 // pred_region
      %390 = dma.done [#allocation4], 16
    $region25: #{tpu_custom_call.1} parent=1 // pred_fallthru
      _
    %391 = vsyncpa [#allocation3], 1
    %392 = vsyncpa [#allocation6], 1
    %393 = vsyncpa [#allocation4], 1

</llo_original>
